<compile_context>
chip_gen: v5e
topology: v5e:2x2
jax: 0.10.0
libtpu: 0.0.40
codegen_flags: <defaults>
</compile_context>

<pallas_src>
import jax
import jax.numpy as jnp
from jax.experimental import pallas as pl
from jax.experimental.pallas import tpu as pltpu

LANE = 128
NEG_BIG = -1e30  # masks padded vocab columns out of the log-softmax


def _round_up(x, m):
    return ((x + m - 1) // m) * m


def _pad2(a, rows, cols):
    r, c = a.shape
    return jnp.pad(a, ((0, rows - r), (0, cols - c)))


def _gru_weightT_lane_padded(w, H, Hp):
    """PyTorch GRU weight slice (3H, Din) -> (Hp, 3*Hp): transposed, per-gate lane-aligned."""
    blocks = []
    for g in range(3):                                  # gates r, z, n
        blk = w[g * H:(g + 1) * H, :].T                 # (Din, H)
        blocks.append(_pad2(blk, Hp, Hp))
    return jnp.concatenate(blocks, axis=1)              # (Hp, 3*Hp)


def _gru_bias_lane_padded(b, H, Hp):
    return jnp.concatenate(
        [jnp.pad(b[g * H:(g + 1) * H], (0, Hp - H)) for g in range(3)]).reshape(1, 3 * Hp)


def prepare_params(params):
    """One-time packing of PyTorch-layout params into pre-transposed, lane-aligned operands."""
    V, H = params['embedding'].shape
    Hp = _round_up(H, LANE)
    Vp = _round_up(V, LANE)

    emb = jnp.pad(params['embedding'], ((0, 0), (0, Hp - H))).reshape(V, 1, Hp)

    w_kT = _pad2(params['W_k'].T, Hp, Hp)
    w_v = _pad2(params['w_v'], 1, Hp)

    # h-LHS fused weights: h @ [W_q^T | W_hh^T(per-gate)] -> [q | gh]
    w_h_comb = jnp.concatenate(
        [_pad2(params['W_q'].T, Hp, Hp),
         _gru_weightT_lane_padded(params['W_hh'], H, Hp)], axis=1)           # (Hp, 4*Hp)

    # ctx-LHS fused weights: ctx @ [W_ih_ctx^T(per-gate) | W_dense_ctx^T] -> [gi_ctx | logits_ctx]
    w_ctx_comb = jnp.concatenate(
        [_gru_weightT_lane_padded(params['W_ih'][:, :H], H, Hp),
         _pad2(params['W_dense'][:, :H].T, Hp, Vp)], axis=1)                 # (Hp, 3*Hp+Vp)

    w_embT = _gru_weightT_lane_padded(params['W_ih'][:, H:], H, Hp)          # (Hp, 3*Hp)
    w_dhT = _pad2(params['W_dense'][:, H:].T, Hp, Vp)                        # (Hp, Vp)

    b_gru = jnp.concatenate(
        [_gru_bias_lane_padded(params['b_ih'], H, Hp),
         _gru_bias_lane_padded(params['b_hh'], H, Hp)], axis=0)              # (2, 3*Hp)
    b_d = jnp.pad(params['b_dense'], (0, Vp - V),
                  constant_values=NEG_BIG).reshape(1, Vp)                    # (1, Vp)

    return {'emb': emb, 'w_kT': w_kT, 'w_v': w_v, 'w_h_comb': w_h_comb,
            'w_ctx_comb': w_ctx_comb, 'w_embT': w_embT, 'w_dhT': w_dhT,
            'b_gru': b_gru, 'b_d': b_d}


def attn_decoder_kernel(idx_ref,                        # scalar-prefetch token id (used by index_map)
                        emb_ref, h_ref, enc_ref,
                        wkT_ref, wv_ref, wh_ref, wctx_ref, wembT_ref, wdhT_ref,
                        bgru_ref, bd_ref,
                        logp_ref, hnew_ref):
    del idx_ref
    Hp = h_ref.shape[1]
    emb = emb_ref[0]                                    # (1, Hp)  dropout(p=0) => identity
    h = h_ref[...]                                      # (1, Hp)
    enc = enc_ref[...]                                  # (S, Hp)

    # Fused h-LHS matmul: [query projection | GRU hidden-side gates]
    h_out = jnp.dot(h, wh_ref[...], preferred_element_type=jnp.float32)      # (1, 4*Hp)
    q = h_out[:, :Hp]                                                        # (1, Hp)
    gh = h_out[:, Hp:] + bgru_ref[1:2, :]                                    # (1, 3*Hp)

    # Additive attention, softmax over the sequence axis (dim 0).
    k = jnp.dot(enc, wkT_ref[...], preferred_element_type=jnp.float32)       # (S, Hp)
    feats = jnp.tanh(q + k)                                                  # (S, Hp)
    scores = jnp.sum(feats * wv_ref[...], axis=-1, keepdims=True)            # (S, 1)
    scores = scores - jnp.max(scores, axis=0, keepdims=True)
    e = jnp.exp(scores)
    attn = e * pl.reciprocal(jnp.sum(e, axis=0, keepdims=True), approx=True)
    ctx = jnp.sum(attn * enc, axis=0, keepdims=True)                         # (1, Hp)

    # Fused ctx-LHS matmul: [GRU input-side gates (ctx half) | vocab logits (ctx half)]
    ctx_out = jnp.dot(ctx, wctx_ref[...], preferred_element_type=jnp.float32)  # (1, 3*Hp+Vp)
    gi = (ctx_out[:, :3 * Hp] + bgru_ref[0:1, :]
          + jnp.dot(emb, wembT_ref[...], preferred_element_type=jnp.float32))  # (1, 3*Hp)
    logits = ctx_out[:, 3 * Hp:] + bd_ref[...]                                  # (1, Vp)

    # GRU cell (PyTorch gate order r, z, n); all slices are 128-lane aligned.
    r = jax.nn.sigmoid(gi[:, 0:Hp] + gh[:, 0:Hp])
    z = jax.nn.sigmoid(gi[:, Hp:2 * Hp] + gh[:, Hp:2 * Hp])
    n = jnp.tanh(gi[:, 2 * Hp:3 * Hp] + r * gh[:, 2 * Hp:3 * Hp])
    h_new = (1.0 - z) * n + z * h                                             # (1, Hp)
    hnew_ref[...] = h_new                                                     # lane-dense store

    # dense([ctx, h_new]) + log_softmax; padded vocab lanes carry -1e30 bias -> no effect.
    logits = logits + jnp.dot(h_new, wdhT_ref[...], preferred_element_type=jnp.float32)
    m = jnp.max(logits, axis=-1, keepdims=True)
    shifted = logits - m
    lse = jnp.log(jnp.sum(jnp.exp(shifted), axis=-1, keepdims=True))
    logp_ref[...] = shifted - lse                                             # lane-dense store


@jax.jit
def attn_decoder_cell(input_idx, hidden_state, enc_outputs, prep):
    """input_idx int (1,1); hidden_state f32 (1,1,H); enc_outputs f32 (S,H); prep from prepare_params."""
    H = hidden_state.shape[-1]
    S = enc_outputs.shape[0]
    V = prep['emb'].shape[0]
    Hp = prep['w_kT'].shape[0]
    Vp = prep['b_d'].shape[1]

    idx = input_idx.reshape(-1).astype(jnp.int32)                       # (1,) scalar prefetch
    h_prev = jnp.pad(hidden_state[-1], ((0, 0), (0, Hp - H)))           # (1, Hp)
    enc = jnp.pad(enc_outputs, ((0, 0), (0, Hp - H)))                   # (S, Hp)

    def const(i, idx_ref):
        return (0, 0)

    grid_spec = pltpu.PrefetchScalarGridSpec(
        num_scalar_prefetch=1,
        grid=(1,),
        in_specs=[
            pl.BlockSpec((1, 1, Hp), lambda i, idx_ref: (idx_ref[0], 0, 0)),  # embedding row gather
            pl.BlockSpec((1, Hp), const),             # h_prev
            pl.BlockSpec((S, Hp), const),             # encoder outputs
            pl.BlockSpec((Hp, Hp), const),            # W_k^T
            pl.BlockSpec((1, Hp), const),             # w_v
            pl.BlockSpec((Hp, 4 * Hp), const),        # [W_q^T | W_hh^T]
            pl.BlockSpec((Hp, 3 * Hp + Vp), const),   # [W_ih_ctx^T | W_dense_ctx^T]
            pl.BlockSpec((Hp, 3 * Hp), const),        # W_ih_emb^T
            pl.BlockSpec((Hp, Vp), const),            # W_dense_h^T
            pl.BlockSpec((2, 3 * Hp), const),         # [b_ih; b_hh]
            pl.BlockSpec((1, Vp), const),             # b_dense (padded with -1e30)
        ],
        out_specs=(pl.BlockSpec((1, Vp), const),
                   pl.BlockSpec((1, Hp), const)),
    )

    logp_pad, h_new_pad = pl.pallas_call(
        attn_decoder_kernel,
        out_shape=(jax.ShapeDtypeStruct((1, Vp), jnp.float32),
                   jax.ShapeDtypeStruct((1, Hp), jnp.float32)),
        grid_spec=grid_spec,
        compiler_params=pltpu.CompilerParams(dimension_semantics=("arbitrary",)),
    )(idx, prep['emb'], h_prev, enc,
      prep['w_kT'], prep['w_v'], prep['w_h_comb'], prep['w_ctx_comb'],
      prep['w_embT'], prep['w_dhT'], prep['b_gru'], prep['b_d'])

    return logp_pad[:, :V], h_new_pad[:, :H].reshape(1, 1, H)


def init_params(key, output_size, hidden_size):
    H, V = hidden_size, output_size
    ks = jax.random.split(key, 10)
    s = 0.1
    return {
        'embedding': jax.random.normal(ks[0], (V, H), jnp.float32) * s,
        'W_q': jax.random.normal(ks[1], (H, H), jnp.float32) * s,           # nn.Linear(H, H, bias=False)
        'W_k': jax.random.normal(ks[2], (H, H), jnp.float32) * s,           # nn.Linear(H, H, bias=False)
        'w_v': jax.random.normal(ks[3], (1, H), jnp.float32) * s,           # nn.Linear(H, 1, bias=False)
        'W_ih': jax.random.normal(ks[4], (3 * H, 2 * H), jnp.float32) * s,  # GRU weight_ih_l0
        'W_hh': jax.random.normal(ks[5], (3 * H, H), jnp.float32) * s,      # GRU weight_hh_l0
        'b_ih': jax.random.normal(ks[6], (3 * H,), jnp.float32) * s,
        'b_hh': jax.random.normal(ks[7], (3 * H,), jnp.float32) * s,
        'W_dense': jax.random.normal(ks[8], (V, 2 * H), jnp.float32) * s,   # nn.Linear(2H, V)
        'b_dense': jax.random.normal(ks[9], (V,), jnp.float32) * s,
    }


def reference(input_idx, hidden_state, enc_outputs, params):
    """Pure-JAX replica of the PyTorch forward for verification."""
    H = hidden_state.shape[-1]
    emb = params['embedding'][input_idx[0, 0]].reshape(1, H)
    h = hidden_state[-1]
    q = h @ params['W_q'].T
    k = enc_outputs @ params['W_k'].T
    feats = jnp.tanh(q + k)
    scores = feats @ params['w_v'].T
    attn = jax.nn.softmax(scores, axis=0)
    ctx = jnp.sum(attn * enc_outputs, axis=0, keepdims=True)
    x = jnp.concatenate([ctx, emb], axis=-1)
    gi = x @ params['W_ih'].T + params['b_ih']
    gh = h @ params['W_hh'].T + params['b_hh']
    r = jax.nn.sigmoid(gi[:, :H] + gh[:, :H])
    z = jax.nn.sigmoid(gi[:, H:2 * H] + gh[:, H:2 * H])
    n = jnp.tanh(gi[:, 2 * H:] + r * gh[:, 2 * H:])
    h_new = (1.0 - z) * n + z * h
    x2 = jnp.concatenate([ctx, h_new], axis=-1)
    logits = x2 @ params['W_dense'].T + params['b_dense']
    logp = jax.nn.log_softmax(logits, axis=1)
    return logp, h_new.reshape(1, 1, H)


if __name__ == "__main__":
    H = 32       # hidden_size
    V = 10       # ouput_size (vocab)
    S = 8        # encoder sequence length
    key = jax.random.PRNGKey(0)
    kp, kh, ke = jax.random.split(key, 3)

    params = init_params(kp, V, H)
    prep = prepare_params(params)            # hoisted one-time weight packing

    input_idx = jnp.array([[3]], dtype=jnp.int32)                      # (seq=1, batch=1)
    hidden_state = jax.random.normal(kh, (1, 1, H), jnp.float32)       # (num_layers=1, batch=1, H)
    enc_outputs = jax.random.normal(ke, (S, H), jnp.float32)           # (S, H)

    logp, h_new = attn_decoder_cell(input_idx, hidden_state, enc_outputs, prep)
    jax.block_until_ready((logp, h_new))

    ref_logp, ref_h = reference(input_idx, hidden_state, enc_outputs, params)
    assert logp.shape == (1, V) and h_new.shape == (1, 1, H)
    # tolerance covers the approx-reciprocal in the attention softmax (EUP vrcp)
    assert jnp.allclose(logp, ref_logp, atol=1e-3), "log-prob mismatch vs reference"
    assert jnp.allclose(h_new, ref_h, atol=1e-3), "hidden-state mismatch vs reference"

    # TODO(synk): nn.Dropout is omitted (p=0 / eval mode => identity).
    print("KERNEL_OK")
</pallas_src>

<mosaic_0001>
module attributes {stable_mosaic.version = 11 : i64} {
  func.func @attn_decoder_kernel(%arg0: i32, %arg1: memref<1xi32, #tpu.memory_space<smem>>, %arg2: memref<1x1x128xf32, #tpu.memory_space<vmem>>, %arg3: memref<1x128xf32, #tpu.memory_space<vmem>>, %arg4: memref<8x128xf32, #tpu.memory_space<vmem>>, %arg5: memref<128x128xf32, #tpu.memory_space<vmem>>, %arg6: memref<1x128xf32, #tpu.memory_space<vmem>>, %arg7: memref<128x512xf32, #tpu.memory_space<vmem>>, %arg8: memref<128x512xf32, #tpu.memory_space<vmem>>, %arg9: memref<128x384xf32, #tpu.memory_space<vmem>>, %arg10: memref<128x128xf32, #tpu.memory_space<vmem>>, %arg11: memref<2x384xf32, #tpu.memory_space<vmem>>, %arg12: memref<1x128xf32, #tpu.memory_space<vmem>>, %arg13: memref<1x128xf32, #tpu.memory_space<vmem>>, %arg14: memref<1x128xf32, #tpu.memory_space<vmem>>) attributes {dimension_semantics = [#tpu.dimension_semantics<arbitrary>], iteration_bounds = array<i64: 1>, scalar_prefetch = 1 : i64, scratch_operands = 0 : i64, tpu.core_type = #tpu.core_type<tc>, window_params = [{transform_indices = @transform_0, window_bounds = array<i64: 1, 1, 128>}, {pipeline_mode = #tpu.pipeline_mode<synchronous>, transform_indices = @transform_1, window_bounds = array<i64: 1, 128>}, {pipeline_mode = #tpu.pipeline_mode<synchronous>, transform_indices = @transform_2, window_bounds = array<i64: 8, 128>}, {pipeline_mode = #tpu.pipeline_mode<synchronous>, transform_indices = @transform_3, window_bounds = array<i64: 128, 128>}, {pipeline_mode = #tpu.pipeline_mode<synchronous>, transform_indices = @transform_4, window_bounds = array<i64: 1, 128>}, {pipeline_mode = #tpu.pipeline_mode<synchronous>, transform_indices = @transform_5, window_bounds = array<i64: 128, 512>}, {pipeline_mode = #tpu.pipeline_mode<synchronous>, transform_indices = @transform_6, window_bounds = array<i64: 128, 512>}, {pipeline_mode = #tpu.pipeline_mode<synchronous>, transform_indices = @transform_7, window_bounds = array<i64: 128, 384>}, {pipeline_mode = #tpu.pipeline_mode<synchronous>, transform_indices = @transform_8, window_bounds = array<i64: 128, 128>}, {pipeline_mode = #tpu.pipeline_mode<synchronous>, transform_indices = @transform_9, window_bounds = array<i64: 2, 384>}, {pipeline_mode = #tpu.pipeline_mode<synchronous>, transform_indices = @transform_10, window_bounds = array<i64: 1, 128>}, {pipeline_mode = #tpu.pipeline_mode<synchronous>, transform_indices = @transform_11, window_bounds = array<i64: 1, 128>}, {pipeline_mode = #tpu.pipeline_mode<synchronous>, transform_indices = @transform_12, window_bounds = array<i64: 1, 128>}]} {
    %c0 = arith.constant 0 : index
    %c0_0 = arith.constant 0 : index
    %c0_1 = arith.constant 0 : index
    %0 = vector.load %arg2[%c0, %c0_0, %c0_1] : memref<1x1x128xf32, #tpu.memory_space<vmem>>, vector<1x1x128xf32>
    %1 = vector.shape_cast %0 : vector<1x1x128xf32> to vector<1x128xf32>
    %c0_2 = arith.constant 0 : index
    %c0_3 = arith.constant 0 : index
    %2 = vector.load %arg3[%c0_2, %c0_3] : memref<1x128xf32, #tpu.memory_space<vmem>>, vector<1x128xf32>
    %c0_4 = arith.constant 0 : index
    %c0_5 = arith.constant 0 : index
    %3 = vector.load %arg4[%c0_4, %c0_5] : memref<8x128xf32, #tpu.memory_space<vmem>>, vector<8x128xf32>
    %c0_6 = arith.constant 0 : index
    %c0_7 = arith.constant 0 : index
    %4 = vector.load %arg7[%c0_6, %c0_7] : memref<128x512xf32, #tpu.memory_space<vmem>>, vector<128x512xf32>
    %cst = arith.constant dense<0.000000e+00> : vector<1x512xf32>
    %5 = tpu.matmul %2, %4, %cst {dimension_numbers = #tpu.dot_dimension_numbers<[1], [0], [0], [1], [0, 0, 1, 1], [], []>} : vector<1x128xf32>, vector<128x512xf32>, vector<1x512xf32> -> vector<1x512xf32>
    %6 = vector.extract_strided_slice %5 {offsets = [0, 0], sizes = [1, 128], strides = [1, 1]} : vector<1x512xf32> to vector<1x128xf32>
    %7 = vector.extract_strided_slice %5 {offsets = [0, 128], sizes = [1, 384], strides = [1, 1]} : vector<1x512xf32> to vector<1x384xf32>
    %c1 = arith.constant 1 : index
    %c0_8 = arith.constant 0 : index
    %8 = vector.load %arg11[%c1, %c0_8] : memref<2x384xf32, #tpu.memory_space<vmem>>, vector<1x384xf32>
    %9 = arith.addf %7, %8 : vector<1x384xf32>
    %c0_9 = arith.constant 0 : index
    %c0_10 = arith.constant 0 : index
    %10 = vector.load %arg5[%c0_9, %c0_10] : memref<128x128xf32, #tpu.memory_space<vmem>>, vector<128x128xf32>
    %cst_11 = arith.constant dense<0.000000e+00> : vector<8x128xf32>
    %11 = tpu.matmul %3, %10, %cst_11 {dimension_numbers = #tpu.dot_dimension_numbers<[1], [0], [0], [1], [0, 0, 1, 1], [], []>} : vector<8x128xf32>, vector<128x128xf32>, vector<8x128xf32> -> vector<8x128xf32>
    %12 = vector.broadcast %6 : vector<1x128xf32> to vector<8x128xf32>
    %13 = arith.addf %12, %11 : vector<8x128xf32>
    %14 = math.tanh %13 : vector<8x128xf32>
    %c0_12 = arith.constant 0 : index
    %c0_13 = arith.constant 0 : index
    %15 = vector.load %arg6[%c0_12, %c0_13] : memref<1x128xf32, #tpu.memory_space<vmem>>, vector<1x128xf32>
    %16 = vector.broadcast %15 : vector<1x128xf32> to vector<8x128xf32>
    %17 = arith.mulf %14, %16 : vector<8x128xf32>
    %cst_14 = arith.constant dense<0.000000e+00> : vector<8xf32>
    %18 = vector.multi_reduction <add>, %17, %cst_14 [1] : vector<8x128xf32> to vector<8xf32>
    %19 = vector.shape_cast %18 : vector<8xf32> to vector<8x1xf32>
    %cst_15 = arith.constant dense<0xFF800000> : vector<1xf32>
    %20 = vector.multi_reduction <maximumf>, %19, %cst_15 [0] : vector<8x1xf32> to vector<1xf32>
    %21 = vector.shape_cast %20 : vector<1xf32> to vector<1x1xf32>
    %22 = vector.broadcast %21 : vector<1x1xf32> to vector<8x1xf32>
    %23 = arith.subf %19, %22 : vector<8x1xf32>
    %24 = math.exp %23 : vector<8x1xf32>
    %cst_16 = arith.constant dense<0.000000e+00> : vector<1xf32>
    %25 = vector.multi_reduction <add>, %24, %cst_16 [0] : vector<8x1xf32> to vector<1xf32>
    %26 = vector.shape_cast %25 : vector<1xf32> to vector<1x1xf32>
    %27 = tpu.reciprocal %26 {approx = true} : vector<1x1xf32> -> vector<1x1xf32>
    %28 = vector.broadcast %27 : vector<1x1xf32> to vector<8x1xf32>
    %29 = arith.mulf %24, %28 : vector<8x1xf32>
    %30 = vector.broadcast %29 : vector<8x1xf32> to vector<8x128xf32>
    %31 = arith.mulf %30, %3 : vector<8x128xf32>
    %cst_17 = arith.constant dense<0.000000e+00> : vector<128xf32>
    %32 = vector.multi_reduction <add>, %31, %cst_17 [0] : vector<8x128xf32> to vector<128xf32>
    %33 = vector.shape_cast %32 : vector<128xf32> to vector<1x128xf32>
    %c0_18 = arith.constant 0 : index
    %c0_19 = arith.constant 0 : index
    %34 = vector.load %arg8[%c0_18, %c0_19] : memref<128x512xf32, #tpu.memory_space<vmem>>, vector<128x512xf32>
    %cst_20 = arith.constant dense<0.000000e+00> : vector<1x512xf32>
    %35 = tpu.matmul %33, %34, %cst_20 {dimension_numbers = #tpu.dot_dimension_numbers<[1], [0], [0], [1], [0, 0, 1, 1], [], []>} : vector<1x128xf32>, vector<128x512xf32>, vector<1x512xf32> -> vector<1x512xf32>
    %36 = vector.extract_strided_slice %35 {offsets = [0, 0], sizes = [1, 384], strides = [1, 1]} : vector<1x512xf32> to vector<1x384xf32>
    %c0_21 = arith.constant 0 : index
    %c0_22 = arith.constant 0 : index
    %37 = vector.load %arg11[%c0_21, %c0_22] : memref<2x384xf32, #tpu.memory_space<vmem>>, vector<1x384xf32>
    %38 = arith.addf %36, %37 : vector<1x384xf32>
    %c0_23 = arith.constant 0 : index
    %c0_24 = arith.constant 0 : index
    %39 = vector.load %arg9[%c0_23, %c0_24] : memref<128x384xf32, #tpu.memory_space<vmem>>, vector<128x384xf32>
    %cst_25 = arith.constant dense<0.000000e+00> : vector<1x384xf32>
    %40 = tpu.matmul %1, %39, %cst_25 {dimension_numbers = #tpu.dot_dimension_numbers<[1], [0], [0], [1], [0, 0, 1, 1], [], []>} : vector<1x128xf32>, vector<128x384xf32>, vector<1x384xf32> -> vector<1x384xf32>
    %41 = arith.addf %38, %40 : vector<1x384xf32>
    %42 = vector.extract_strided_slice %35 {offsets = [0, 384], sizes = [1, 128], strides = [1, 1]} : vector<1x512xf32> to vector<1x128xf32>
    %c0_26 = arith.constant 0 : index
    %c0_27 = arith.constant 0 : index
    %43 = vector.load %arg12[%c0_26, %c0_27] : memref<1x128xf32, #tpu.memory_space<vmem>>, vector<1x128xf32>
    %44 = arith.addf %42, %43 : vector<1x128xf32>
    %45 = vector.extract_strided_slice %41 {offsets = [0, 0], sizes = [1, 128], strides = [1, 1]} : vector<1x384xf32> to vector<1x128xf32>
    %46 = vector.extract_strided_slice %9 {offsets = [0, 0], sizes = [1, 128], strides = [1, 1]} : vector<1x384xf32> to vector<1x128xf32>
    %47 = arith.addf %45, %46 : vector<1x128xf32>
    %48 = arith.negf %47 : vector<1x128xf32>
    %49 = math.exp %48 : vector<1x128xf32>
    %cst_28 = arith.constant 1.000000e+00 : f32
    %50 = vector.broadcast %cst_28 : f32 to vector<1x128xf32>
    %51 = arith.addf %50, %49 : vector<1x128xf32>
    %52 = arith.divf %50, %51 : vector<1x128xf32>
    %53 = vector.extract_strided_slice %41 {offsets = [0, 128], sizes = [1, 128], strides = [1, 1]} : vector<1x384xf32> to vector<1x128xf32>
    %54 = vector.extract_strided_slice %9 {offsets = [0, 128], sizes = [1, 128], strides = [1, 1]} : vector<1x384xf32> to vector<1x128xf32>
    %55 = arith.addf %53, %54 : vector<1x128xf32>
    %56 = arith.negf %55 : vector<1x128xf32>
    %57 = math.exp %56 : vector<1x128xf32>
    %cst_29 = arith.constant 1.000000e+00 : f32
    %58 = vector.broadcast %cst_29 : f32 to vector<1x128xf32>
    %59 = arith.addf %58, %57 : vector<1x128xf32>
    %60 = arith.divf %58, %59 : vector<1x128xf32>
    %61 = vector.extract_strided_slice %41 {offsets = [0, 256], sizes = [1, 128], strides = [1, 1]} : vector<1x384xf32> to vector<1x128xf32>
    %62 = vector.extract_strided_slice %9 {offsets = [0, 256], sizes = [1, 128], strides = [1, 1]} : vector<1x384xf32> to vector<1x128xf32>
    %63 = arith.mulf %52, %62 : vector<1x128xf32>
    %64 = arith.addf %61, %63 : vector<1x128xf32>
    %65 = math.tanh %64 : vector<1x128xf32>
    %cst_30 = arith.constant 1.000000e+00 : f32
    %66 = vector.broadcast %cst_30 : f32 to vector<1x128xf32>
    %67 = arith.subf %66, %60 : vector<1x128xf32>
    %68 = arith.mulf %67, %65 : vector<1x128xf32>
    %69 = arith.mulf %60, %2 : vector<1x128xf32>
    %70 = arith.addf %68, %69 : vector<1x128xf32>
    %c0_31 = arith.constant 0 : index
    %c0_32 = arith.constant 0 : index
    %71 = vector.load %arg14[%c0_31, %c0_32] : memref<1x128xf32, #tpu.memory_space<vmem>>, vector<1x128xf32>
    tpu.vector_store %arg14[%c0_31, %c0_32], %70 {strides = array<i32>} : memref<1x128xf32, #tpu.memory_space<vmem>>, vector<1x128xf32>,
    %c0_33 = arith.constant 0 : index
    %c0_34 = arith.constant 0 : index
    %72 = vector.load %arg10[%c0_33, %c0_34] : memref<128x128xf32, #tpu.memory_space<vmem>>, vector<128x128xf32>
    %cst_35 = arith.constant dense<0.000000e+00> : vector<1x128xf32>
    %73 = tpu.matmul %70, %72, %cst_35 {dimension_numbers = #tpu.dot_dimension_numbers<[1], [0], [0], [1], [0, 0, 1, 1], [], []>} : vector<1x128xf32>, vector<128x128xf32>, vector<1x128xf32> -> vector<1x128xf32>
    %74 = arith.addf %44, %73 : vector<1x128xf32>
    %cst_36 = arith.constant dense<0xFF800000> : vector<1xf32>
    %75 = vector.multi_reduction <maximumf>, %74, %cst_36 [1] : vector<1x128xf32> to vector<1xf32>
    %76 = vector.shape_cast %75 : vector<1xf32> to vector<1x1xf32>
    %77 = vector.broadcast %76 : vector<1x1xf32> to vector<1x128xf32>
    %78 = arith.subf %74, %77 : vector<1x128xf32>
    %79 = math.exp %78 : vector<1x128xf32>
    %cst_37 = arith.constant dense<0.000000e+00> : vector<1xf32>
    %80 = vector.multi_reduction <add>, %79, %cst_37 [1] : vector<1x128xf32> to vector<1xf32>
    %81 = vector.shape_cast %80 : vector<1xf32> to vector<1x1xf32>
    %82 = math.log %81 : vector<1x1xf32>
    %83 = vector.broadcast %82 : vector<1x1xf32> to vector<1x128xf32>
    %84 = arith.subf %78, %83 : vector<1x128xf32>
    %c0_38 = arith.constant 0 : index
    %c0_39 = arith.constant 0 : index
    %85 = vector.load %arg13[%c0_38, %c0_39] : memref<1x128xf32, #tpu.memory_space<vmem>>, vector<1x128xf32>
    tpu.vector_store %arg13[%c0_38, %c0_39], %84 {strides = array<i32>} : memref<1x128xf32, #tpu.memory_space<vmem>>, vector<1x128xf32>,
    return
  }
  func.func @transform_0(%arg0: i32, %arg1: memref<1xi32, #tpu.memory_space<smem>>) -> (i32, i32, i32) {
    %c0 = arith.constant 0 : index
    %0 = memref.load %arg1[%c0] : memref<1xi32, #tpu.memory_space<smem>>
    %c0_i32 = arith.constant 0 : i32
    %c0_i32_0 = arith.constant 0 : i32
    %c0_i32_1 = arith.constant 0 : i32
    return %0, %c0_i32, %c0_i32_0 : i32, i32, i32
  }
  func.func @transform_1(%arg0: i32, %arg1: memref<1xi32, #tpu.memory_space<smem>>) -> (i32, i32) {
    %c0_i32 = arith.constant 0 : i32
    %c0_i32_0 = arith.constant 0 : i32
    %c0_i32_1 = arith.constant 0 : i32
    return %c0_i32, %c0_i32_0 : i32, i32
  }
  func.func @transform_2(%arg0: i32, %arg1: memref<1xi32, #tpu.memory_space<smem>>) -> (i32, i32) {
    %c0_i32 = arith.constant 0 : i32
    %c0_i32_0 = arith.constant 0 : i32
    %c0_i32_1 = arith.constant 0 : i32
    return %c0_i32, %c0_i32_0 : i32, i32
  }
  func.func @transform_3(%arg0: i32, %arg1: memref<1xi32, #tpu.memory_space<smem>>) -> (i32, i32) {
    %c0_i32 = arith.constant 0 : i32
    %c0_i32_0 = arith.constant 0 : i32
    %c0_i32_1 = arith.constant 0 : i32
    return %c0_i32, %c0_i32_0 : i32, i32
  }
  func.func @transform_4(%arg0: i32, %arg1: memref<1xi32, #tpu.memory_space<smem>>) -> (i32, i32) {
    %c0_i32 = arith.constant 0 : i32
    %c0_i32_0 = arith.constant 0 : i32
    %c0_i32_1 = arith.constant 0 : i32
    return %c0_i32, %c0_i32_0 : i32, i32
  }
  func.func @transform_5(%arg0: i32, %arg1: memref<1xi32, #tpu.memory_space<smem>>) -> (i32, i32) {
    %c0_i32 = arith.constant 0 : i32
    %c0_i32_0 = arith.constant 0 : i32
    %c0_i32_1 = arith.constant 0 : i32
    return %c0_i32, %c0_i32_0 : i32, i32
  }
  func.func @transform_6(%arg0: i32, %arg1: memref<1xi32, #tpu.memory_space<smem>>) -> (i32, i32) {
    %c0_i32 = arith.constant 0 : i32
    %c0_i32_0 = arith.constant 0 : i32
    %c0_i32_1 = arith.constant 0 : i32
    return %c0_i32, %c0_i32_0 : i32, i32
  }
  func.func @transform_7(%arg0: i32, %arg1: memref<1xi32, #tpu.memory_space<smem>>) -> (i32, i32) {
    %c0_i32 = arith.constant 0 : i32
    %c0_i32_0 = arith.constant 0 : i32
    %c0_i32_1 = arith.constant 0 : i32
    return %c0_i32, %c0_i32_0 : i32, i32
  }
  func.func @transform_8(%arg0: i32, %arg1: memref<1xi32, #tpu.memory_space<smem>>) -> (i32, i32) {
    %c0_i32 = arith.constant 0 : i32
    %c0_i32_0 = arith.constant 0 : i32
    %c0_i32_1 = arith.constant 0 : i32
    return %c0_i32, %c0_i32_0 : i32, i32
  }
  func.func @transform_9(%arg0: i32, %arg1: memref<1xi32, #tpu.memory_space<smem>>) -> (i32, i32) {
    %c0_i32 = arith.constant 0 : i32
    %c0_i32_0 = arith.constant 0 : i32
    %c0_i32_1 = arith.constant 0 : i32
    return %c0_i32, %c0_i32_0 : i32, i32
  }
  func.func @transform_10(%arg0: i32, %arg1: memref<1xi32, #tpu.memory_space<smem>>) -> (i32, i32) {
    %c0_i32 = arith.constant 0 : i32
    %c0_i32_0 = arith.constant 0 : i32
    %c0_i32_1 = arith.constant 0 : i32
    return %c0_i32, %c0_i32_0 : i32, i32
  }
  func.func @transform_11(%arg0: i32, %arg1: memref<1xi32, #tpu.memory_space<smem>>) -> (i32, i32) {
    %c0_i32 = arith.constant 0 : i32
    %c0_i32_0 = arith.constant 0 : i32
    %c0_i32_1 = arith.constant 0 : i32
    return %c0_i32, %c0_i32_0 : i32, i32
  }
  func.func @transform_12(%arg0: i32, %arg1: memref<1xi32, #tpu.memory_space<smem>>) -> (i32, i32) {
    %c0_i32 = arith.constant 0 : i32
    %c0_i32_0 = arith.constant 0 : i32
    %c0_i32_1 = arith.constant 0 : i32
    return %c0_i32, %c0_i32_0 : i32, i32
  }
}

</mosaic_0001>

<llo_original>
// kernel: attn_decoder_cell.1
$region0: #{attn_decoder_cell.1}
  #allocation0 [shape = 'u32[]', space=smem, size = 0x4, offset = 0x4, fixed_abs, tag = 'smem constant byte address 0x4 - core index']
  #allocation1 [shape = 'u32[72,128]{1,0:T(1,128)}', space=vmem, size = 0x9000, scoped, tag = 'internal scratch']
  #allocation2 [shape = 's32[1]{0}', space=sflag, size = 0x4, scoped, tag = 'scoped memory for attn_decoder_cell.1']
  #allocation3 [shape = 's32[1]{0:T(128)S(6)}', space=smem, size = 0x200, scoped, tag = 'prefetched SMEM operand 0']
  %s0 = inlined_call_operand.<no memory space> [shape: s32[1], index: 0, kind: input, shape index: {}]
  %s1 = inlined_call_operand.vmem [shape: f32[10,1,128], index: 1, kind: input, shape index: {}]
  %s2 = inlined_call_operand.vmem [shape: f32[1,128], index: 2, kind: input, shape index: {}]
  %s3 = inlined_call_operand.vmem [shape: f32[8,128], index: 3, kind: input, shape index: {}]
  %s4 = inlined_call_operand.hbm [shape: f32[128,128], index: 4, kind: input, shape index: {}]
  %s5 = inlined_call_operand.vmem [shape: f32[1,128], index: 5, kind: input, shape index: {}]
  %s6 = inlined_call_operand.hbm [shape: f32[128,512], index: 6, kind: input, shape index: {}]
  %s7 = inlined_call_operand.hbm [shape: f32[128,512], index: 7, kind: input, shape index: {}]
  %s8 = inlined_call_operand.hbm [shape: f32[128,384], index: 8, kind: input, shape index: {}]
  %s9 = inlined_call_operand.hbm [shape: f32[128,128], index: 9, kind: input, shape index: {}]
  %s10 = inlined_call_operand.vmem [shape: f32[2,384], index: 10, kind: input, shape index: {}]
  %s11 = inlined_call_operand.vmem [shape: f32[1,128], index: 11, kind: input, shape index: {}]
  %s12 = inlined_call_operand.hbm [shape: f32[1,128], index: 12, kind: output, shape index: {0}]
  %s13 = inlined_call_operand.vmem [shape: f32[1,128], index: 13, kind: output, shape index: {1}]
  %14 = xla_tuple %s12, %s13
  %s15 = sld [smem:[#allocation0]]
  $region82: #{attn_decoder_cell.1} parent=0
    _
  %s17 = ssub.s32 1, %s15
  %s18 = scalar_select 0, %s17, %s15
  %19 = sst [smem:[#allocation3]] %s0
  $region1: #{attn_decoder_cell.1} parent=0
    #allocation4 [shape = 'u8[65536]{0}', space=vmem, size = 0x10000, scoped, tag = 'input window, operand 4, single buffered']
    #allocation5 [shape = 's32[1]{0}', space=sflag, size = 0x4, scoped, tag = 'scoped memory for attn_decoder_cell.1']
    #allocation6 [shape = 's32[1]{0}', space=sflag, size = 0x4, scoped, tag = 'scoped memory for attn_decoder_cell.1']
    #allocation7 [shape = 'u8[262144]{0}', space=vmem, size = 0x40000, scoped, tag = 'input window, operand 6, single buffered']
    #allocation8 [shape = 's32[1]{0}', space=sflag, size = 0x4, scoped, tag = 'scoped memory for attn_decoder_cell.1']
    #allocation9 [shape = 'u8[262144]{0}', space=vmem, size = 0x40000, scoped, tag = 'input window, operand 7, single buffered']
    #allocation10 [shape = 'u8[196608]{0}', space=vmem, size = 0x30000, scoped, tag = 'input window, operand 8, single buffered']
    #allocation11 [shape = 's32[1]{0}', space=sflag, size = 0x4, scoped, tag = 'scoped memory for attn_decoder_cell.1']
    #allocation12 [shape = 'u8[65536]{0}', space=vmem, size = 0x10000, scoped, tag = 'input window, operand 9, single buffered']
    #allocation13 [shape = 'u8[512]{0}', space=vmem, size = 0x400, scoped, tag = 'output window, operand 0, single buffered']
    %20 = vsyncpa [#allocation5], 0
    %21 = vsyncpa [#allocation8], 0
    %22 = vsyncpa [#allocation11], 0
    %23 = vsyncpa [#allocation6], 0
    // Predicated region
    $region2: #{attn_decoder_cell.1} parent=1 // pred_check
      _
    $region3: #{attn_decoder_cell.1} parent=1 // pred_check_branch
      %25 = sbr.rel (0) target = $region5
    $region4: #{attn_decoder_cell.1} parent=1 // pred_region
      %s26 = sld [smem:[#allocation3]]
      %p27 = scmp.lt.s32.totalorder %s26, 9
      %s28 = scalar_select %p27, %s26, 9
      %s29 = scalar_lea.vmem %s1, %s28
      %s30 = sld [smem:[#allocation3]]
    $region5: #{attn_decoder_cell.1} parent=1 // pred_fallthru
      _
    // Predicated region
    $region6: #{attn_decoder_cell.1} parent=1 // pred_check
      _
    $region7: #{attn_decoder_cell.1} parent=1 // pred_check_branch
      %32 = sbr.rel (0) target = $region9
    $region8: #{attn_decoder_cell.1} parent=1 // pred_region
      _
    $region9: #{attn_decoder_cell.1} parent=1 // pred_fallthru
      _
    // Predicated region
    $region10: #{attn_decoder_cell.1} parent=1 // pred_check
      _
    $region11: #{attn_decoder_cell.1} parent=1 // pred_check_branch
      %34 = sbr.rel (0) target = $region13
    $region12: #{attn_decoder_cell.1} parent=1 // pred_region
      _
    $region13: #{attn_decoder_cell.1} parent=1 // pred_fallthru
      _
    // Predicated region
    $region14: #{attn_decoder_cell.1} parent=1 // pred_check
      _
    $region15: #{attn_decoder_cell.1} parent=1 // pred_check_branch
      %36 = sbr.rel (0) target = $region17
    $region16: #{attn_decoder_cell.1} parent=1 // pred_region
      %38 = vsyncadd [#allocation5], 0
      %s39 = sshll.u32 %s4, 4
      %s40 = int_to_ptr.hbm [resolvable:$true] %s39
      %s41 = sshll.u32 [#allocation4], 4
      %s42 = int_to_ptr.vmem [resolvable:$true] %s41
      %47 = dma.hbm_to_vmem [thread:$0]  %s40, 2048, %s42, [#allocation5], 128, 128, 8
    $region17: #{attn_decoder_cell.1} parent=1 // pred_fallthru
      _
    // Predicated region
    $region18: #{attn_decoder_cell.1} parent=1 // pred_check
      _
    $region19: #{attn_decoder_cell.1} parent=1 // pred_check_branch
      %49 = sbr.rel (0) target = $region21
    $region20: #{attn_decoder_cell.1} parent=1 // pred_region
      _
    $region21: #{attn_decoder_cell.1} parent=1 // pred_fallthru
      _
    // Predicated region
    $region22: #{attn_decoder_cell.1} parent=1 // pred_check
      _
    $region23: #{attn_decoder_cell.1} parent=1 // pred_check_branch
      %51 = sbr.rel (0) target = $region25
    $region24: #{attn_decoder_cell.1} parent=1 // pred_region
      %53 = vsyncadd [#allocation8], 0
      %s54 = sshll.u32 %s6, 4
      %s55 = int_to_ptr.hbm [resolvable:$true] %s54
      %s56 = sshll.u32 [#allocation7], 4
      %s57 = int_to_ptr.vmem [resolvable:$true] %s56
      %62 = dma.hbm_to_vmem [thread:$0]  %s55, 8192, %s57, [#allocation8], 512, 512, 32
    $region25: #{attn_decoder_cell.1} parent=1 // pred_fallthru
      _
    // Predicated region
    $region26: #{attn_decoder_cell.1} parent=1 // pred_check
      _
    $region27: #{attn_decoder_cell.1} parent=1 // pred_check_branch
      %64 = sbr.rel (0) target = $region29
    $region28: #{attn_decoder_cell.1} parent=1 // pred_region
      %66 = vsyncadd [#allocation8], 0
      %s67 = sshll.u32 %s7, 4
      %s68 = int_to_ptr.hbm [resolvable:$true] %s67
      %s69 = sshll.u32 [#allocation9], 4
      %s70 = int_to_ptr.vmem [resolvable:$true] %s69
      %75 = dma.hbm_to_vmem [thread:$0]  %s68, 8192, %s70, [#allocation8], 512, 512, 32
    $region29: #{attn_decoder_cell.1} parent=1 // pred_fallthru
      _
    // Predicated region
    $region30: #{attn_decoder_cell.1} parent=1 // pred_check
      _
    $region31: #{attn_decoder_cell.1} parent=1 // pred_check_branch
      %77 = sbr.rel (0) target = $region33
    $region32: #{attn_decoder_cell.1} parent=1 // pred_region
      %79 = vsyncadd [#allocation11], 0
      %s80 = sshll.u32 %s8, 4
      %s81 = int_to_ptr.hbm [resolvable:$true] %s80
      %s82 = sshll.u32 [#allocation10], 4
      %s83 = int_to_ptr.vmem [resolvable:$true] %s82
      %88 = dma.hbm_to_vmem [thread:$0]  %s81, 6144, %s83, [#allocation11], 384, 384, 24
    $region33: #{attn_decoder_cell.1} parent=1 // pred_fallthru
      _
    // Predicated region
    $region34: #{attn_decoder_cell.1} parent=1 // pred_check
      _
    $region35: #{attn_decoder_cell.1} parent=1 // pred_check_branch
      %90 = sbr.rel (0) target = $region37
    $region36: #{attn_decoder_cell.1} parent=1 // pred_region
      %92 = vsyncadd [#allocation11], 0
      %s93 = sshll.u32 %s9, 4
      %s94 = int_to_ptr.hbm [resolvable:$true] %s93
      %s95 = sshll.u32 [#allocation12], 4
      %s96 = int_to_ptr.vmem [resolvable:$true] %s95
      %101 = dma.hbm_to_vmem [thread:$0]  %s94, 2048, %s96, [#allocation11], 128, 128, 8
    $region37: #{attn_decoder_cell.1} parent=1 // pred_fallthru
      _
    // Predicated region
    $region38: #{attn_decoder_cell.1} parent=1 // pred_check
      _
    $region39: #{attn_decoder_cell.1} parent=1 // pred_check_branch
      %103 = sbr.rel (0) target = $region41
    $region40: #{attn_decoder_cell.1} parent=1 // pred_region
      _
    $region41: #{attn_decoder_cell.1} parent=1 // pred_fallthru
      _
    // Predicated region
    $region42: #{attn_decoder_cell.1} parent=1 // pred_check
      _
    $region43: #{attn_decoder_cell.1} parent=1 // pred_check_branch
      %105 = sbr.rel (0) target = $region45
    $region44: #{attn_decoder_cell.1} parent=1 // pred_region
      _
    $region45: #{attn_decoder_cell.1} parent=1 // pred_fallthru
      _
    // Predicated region
    $region46: #{attn_decoder_cell.1} parent=1 // pred_check
      _
    $region47: #{attn_decoder_cell.1} parent=1 // pred_check_branch
      %107 = sbr.rel (0) target = $region49
    $region48: #{attn_decoder_cell.1} parent=1 // pred_region
      %109 = dma.done [#allocation5], 2048
    $region49: #{attn_decoder_cell.1} parent=1 // pred_fallthru
      _
    // Predicated region
    $region50: #{attn_decoder_cell.1} parent=1 // pred_check
      _
    $region51: #{attn_decoder_cell.1} parent=1 // pred_check_branch
      %111 = sbr.rel (0) target = $region53
    $region52: #{attn_decoder_cell.1} parent=1 // pred_region
      %113 = dma.done [#allocation8], 8192
    $region53: #{attn_decoder_cell.1} parent=1 // pred_fallthru
      _
    // Predicated region
    $region54: #{attn_decoder_cell.1} parent=1 // pred_check
      _
    $region55: #{attn_decoder_cell.1} parent=1 // pred_check_branch
      %115 = sbr.rel (0) target = $region57
    $region56: #{attn_decoder_cell.1} parent=1 // pred_region
      %117 = dma.done [#allocation8], 8192
    $region57: #{attn_decoder_cell.1} parent=1 // pred_fallthru
      _
    // Predicated region
    $region58: #{attn_decoder_cell.1} parent=1 // pred_check
      _
    $region59: #{attn_decoder_cell.1} parent=1 // pred_check_branch
      %119 = sbr.rel (0) target = $region61
    $region60: #{attn_decoder_cell.1} parent=1 // pred_region
      %121 = dma.done [#allocation11], 6144
    $region61: #{attn_decoder_cell.1} parent=1 // pred_fallthru
      _
    // Predicated region
    $region62: #{attn_decoder_cell.1} parent=1 // pred_check
      _
    $region63: #{attn_decoder_cell.1} parent=1 // pred_check_branch
      %123 = sbr.rel (0) target = $region65
    $region64: #{attn_decoder_cell.1} parent=1 // pred_region
      %125 = dma.done [#allocation11], 2048
    $region65: #{attn_decoder_cell.1} parent=1 // pred_fallthru
      _
    %s126 = sld [smem:[#allocation3]]
    %p127 = scmp.lt.s32.totalorder %s126, 9
    %s128 = scalar_select %p127, %s126, 9
    %s129 = scalar_lea.vmem %s1, %s128
    %s130 = sld [smem:[#allocation3]]
    %p131 = scmp.lt.s32.totalorder %s130, 9
    %s132 = scalar_select %p131, %s130, 9
    %s133 = scalar_lea.vmem %s1, %s132
    %s134 = sld [smem:[#allocation3]]
    %v135 = vld [vmem:[%s133] sm:$0x1]
    %v136 = vld [vmem:[%s2] sm:$0x1]
    %v137 = vld [vmem:[%s3] sm:$0xff]
    %v138 = vld [vmem:[#allocation7] sm:$0xff]
    %v139 = vld [vmem:[#allocation7 + $0x8] sm:$0xff]
    %v140 = vld [vmem:[#allocation7 + $0x10] sm:$0xff]
    %v141 = vld [vmem:[#allocation7 + $0x18] sm:$0xff]
    %v142 = vld [vmem:[#allocation7 + $0x20] sm:$0xff]
    %v143 = vld [vmem:[#allocation7 + $0x28] sm:$0xff]
    %v144 = vld [vmem:[#allocation7 + $0x30] sm:$0xff]
    %v145 = vld [vmem:[#allocation7 + $0x38] sm:$0xff]
    %v146 = vld [vmem:[#allocation7 + $0x40] sm:$0xff]
    %v147 = vld [vmem:[#allocation7 + $0x48] sm:$0xff]
    %v148 = vld [vmem:[#allocation7 + $0x50] sm:$0xff]
    %v149 = vld [vmem:[#allocation7 + $0x58] sm:$0xff]
    %v150 = vld [vmem:[#allocation7 + $0x60] sm:$0xff]
    %v151 = vld [vmem:[#allocation7 + $0x68] sm:$0xff]
    %v152 = vld [vmem:[#allocation7 + $0x70] sm:$0xff]
    %v153 = vld [vmem:[#allocation7 + $0x78] sm:$0xff]
    %v154 = vld [vmem:[#allocation7 + $0x80] sm:$0xff]
    %v155 = vld [vmem:[#allocation7 + $0x88] sm:$0xff]
    %v156 = vld [vmem:[#allocation7 + $0x90] sm:$0xff]
    %v157 = vld [vmem:[#allocation7 + $0x98] sm:$0xff]
    %v158 = vld [vmem:[#allocation7 + $0xa0] sm:$0xff]
    %v159 = vld [vmem:[#allocation7 + $0xa8] sm:$0xff]
    %v160 = vld [vmem:[#allocation7 + $0xb0] sm:$0xff]
    %v161 = vld [vmem:[#allocation7 + $0xb8] sm:$0xff]
    %v162 = vld [vmem:[#allocation7 + $0xc0] sm:$0xff]
    %v163 = vld [vmem:[#allocation7 + $0xc8] sm:$0xff]
    %v164 = vld [vmem:[#allocation7 + $0xd0] sm:$0xff]
    %v165 = vld [vmem:[#allocation7 + $0xd8] sm:$0xff]
    %v166 = vld [vmem:[#allocation7 + $0xe0] sm:$0xff]
    %v167 = vld [vmem:[#allocation7 + $0xe8] sm:$0xff]
    %v168 = vld [vmem:[#allocation7 + $0xf0] sm:$0xff]
    %v169 = vld [vmem:[#allocation7 + $0xf8] sm:$0xff]
    %v170 = vld [vmem:[#allocation7 + $0x100] sm:$0xff]
    %v171 = vld [vmem:[#allocation7 + $0x108] sm:$0xff]
    %v172 = vld [vmem:[#allocation7 + $0x110] sm:$0xff]
    %v173 = vld [vmem:[#allocation7 + $0x118] sm:$0xff]
    %v174 = vld [vmem:[#allocation7 + $0x120] sm:$0xff]
    %v175 = vld [vmem:[#allocation7 + $0x128] sm:$0xff]
    %v176 = vld [vmem:[#allocation7 + $0x130] sm:$0xff]
    %v177 = vld [vmem:[#allocation7 + $0x138] sm:$0xff]
    %v178 = vld [vmem:[#allocation7 + $0x140] sm:$0xff]
    %v179 = vld [vmem:[#allocation7 + $0x148] sm:$0xff]
    %v180 = vld [vmem:[#allocation7 + $0x150] sm:$0xff]
    %v181 = vld [vmem:[#allocation7 + $0x158] sm:$0xff]
    %v182 = vld [vmem:[#allocation7 + $0x160] sm:$0xff]
    %v183 = vld [vmem:[#allocation7 + $0x168] sm:$0xff]
    %v184 = vld [vmem:[#allocation7 + $0x170] sm:$0xff]
    %v185 = vld [vmem:[#allocation7 + $0x178] sm:$0xff]
    %v186 = vld [vmem:[#allocation7 + $0x180] sm:$0xff]
    %v187 = vld [vmem:[#allocation7 + $0x188] sm:$0xff]
    %v188 = vld [vmem:[#allocation7 + $0x190] sm:$0xff]
    %v189 = vld [vmem:[#allocation7 + $0x198] sm:$0xff]
    %v190 = vld [vmem:[#allocation7 + $0x1a0] sm:$0xff]
    %v191 = vld [vmem:[#allocation7 + $0x1a8] sm:$0xff]
    %v192 = vld [vmem:[#allocation7 + $0x1b0] sm:$0xff]
    %v193 = vld [vmem:[#allocation7 + $0x1b8] sm:$0xff]
    %v194 = vld [vmem:[#allocation7 + $0x1c0] sm:$0xff]
    %v195 = vld [vmem:[#allocation7 + $0x1c8] sm:$0xff]
    %v196 = vld [vmem:[#allocation7 + $0x1d0] sm:$0xff]
    %v197 = vld [vmem:[#allocation7 + $0x1d8] sm:$0xff]
    %v198 = vld [vmem:[#allocation7 + $0x1e0] sm:$0xff]
    %v199 = vld [vmem:[#allocation7 + $0x1e8] sm:$0xff]
    %v200 = vld [vmem:[#allocation7 + $0x1f0] sm:$0xff]
    %v201 = vld [vmem:[#allocation7 + $0x1f8] sm:$0xff]
    %202 = vmatpush.msra.mxu0 %v198
    %203 = vmatpush.msra.mxu0 %v194
    %204 = vmatpush.msra.mxu0 %v190
    %205 = vmatpush.msra.mxu0 %v186
    %206 = vmatpush.msra.mxu0 %v182
    %207 = vmatpush.msra.mxu0 %v178
    %208 = vmatpush.msra.mxu0 %v174
    %209 = vmatpush.msra.mxu0 %v170
    %210 = vmatpush.msra.mxu0 %v166
    %211 = vmatpush.msra.mxu0 %v162
    %212 = vmatpush.msra.mxu0 %v158
    %213 = vmatpush.msra.mxu0 %v154
    %214 = vmatpush.msra.mxu0 %v150
    %215 = vmatpush.msra.mxu0 %v146
    %216 = vmatpush.msra.mxu0 %v142
    %217 = vmatpush.msra.mxu0 %v138
    %218 = vmatmul.f32.gmra.mxu0 %v136
    %v219 = vpop.f32.mrf.mxu0
    %v220 = vadd.f32 0.0, %v219
    %221 = vdwg.mxu0
    %222 = vmatpush.msra.mxu0 %v199
    %223 = vmatpush.msra.mxu0 %v195
    %224 = vmatpush.msra.mxu0 %v191
    %225 = vmatpush.msra.mxu0 %v187
    %226 = vmatpush.msra.mxu0 %v183
    %227 = vmatpush.msra.mxu0 %v179
    %228 = vmatpush.msra.mxu0 %v175
    %229 = vmatpush.msra.mxu0 %v171
    %230 = vmatpush.msra.mxu0 %v167
    %231 = vmatpush.msra.mxu0 %v163
    %232 = vmatpush.msra.mxu0 %v159
    %233 = vmatpush.msra.mxu0 %v155
    %234 = vmatpush.msra.mxu0 %v151
    %235 = vmatpush.msra.mxu0 %v147
    %236 = vmatpush.msra.mxu0 %v143
    %237 = vmatpush.msra.mxu0 %v139
    %238 = vmatmul.f32.gmra.mxu0 %v136
    %v239 = vpop.f32.mrf.mxu0
    %v240 = vadd.f32 0.0, %v239
    %241 = vdwg.mxu0
    %242 = vmatpush.msra.mxu0 %v200
    %243 = vmatpush.msra.mxu0 %v196
    %244 = vmatpush.msra.mxu0 %v192
    %245 = vmatpush.msra.mxu0 %v188
    %246 = vmatpush.msra.mxu0 %v184
    %247 = vmatpush.msra.mxu0 %v180
    %248 = vmatpush.msra.mxu0 %v176
    %249 = vmatpush.msra.mxu0 %v172
    %250 = vmatpush.msra.mxu0 %v168
    %251 = vmatpush.msra.mxu0 %v164
    %252 = vmatpush.msra.mxu0 %v160
    %253 = vmatpush.msra.mxu0 %v156
    %254 = vmatpush.msra.mxu0 %v152
    %255 = vmatpush.msra.mxu0 %v148
    %256 = vmatpush.msra.mxu0 %v144
    %257 = vmatpush.msra.mxu0 %v140
    %258 = vmatmul.f32.gmra.mxu0 %v136
    %v259 = vpop.f32.mrf.mxu0
    %v260 = vadd.f32 0.0, %v259
    %261 = vdwg.mxu0
    %262 = vmatpush.msra.mxu0 %v201
    %263 = vmatpush.msra.mxu0 %v197
    %264 = vmatpush.msra.mxu0 %v193
    %265 = vmatpush.msra.mxu0 %v189
    %266 = vmatpush.msra.mxu0 %v185
    %267 = vmatpush.msra.mxu0 %v181
    %268 = vmatpush.msra.mxu0 %v177
    %269 = vmatpush.msra.mxu0 %v173
    %270 = vmatpush.msra.mxu0 %v169
    %271 = vmatpush.msra.mxu0 %v165
    %272 = vmatpush.msra.mxu0 %v161
    %273 = vmatpush.msra.mxu0 %v157
    %274 = vmatpush.msra.mxu0 %v153
    %275 = vmatpush.msra.mxu0 %v149
    %276 = vmatpush.msra.mxu0 %v145
    %277 = vmatpush.msra.mxu0 %v141
    %278 = vmatmul.f32.gmra.mxu0 %v136
    %v279 = vpop.f32.mrf.mxu0
    %v280 = vadd.f32 0.0, %v279
    %281 = vdwg.mxu0
    %s282 = scalar_lea.vmem %s10, 1
    %v283 = vld [vmem:[%s282] ss:$2 sm:$0x7]
    %v285 = vperm.slane %v283, 0
    %v286 = vperm.slane %v283, 1
    %v287 = vperm.slane %v283, 2
    %v291 = vadd.f32 %v240, %v285
    %v292 = vadd.f32 %v260, %v286
    %v293 = vadd.f32 %v280, %v287
    %v294 = vld [vmem:[#allocation4] sm:$0xff]
    %v295 = vld [vmem:[#allocation4 + $0x8] sm:$0xff]
    %v296 = vld [vmem:[#allocation4 + $0x10] sm:$0xff]
    %v297 = vld [vmem:[#allocation4 + $0x18] sm:$0xff]
    %v298 = vld [vmem:[#allocation4 + $0x20] sm:$0xff]
    %v299 = vld [vmem:[#allocation4 + $0x28] sm:$0xff]
    %v300 = vld [vmem:[#allocation4 + $0x30] sm:$0xff]
    %v301 = vld [vmem:[#allocation4 + $0x38] sm:$0xff]
    %v302 = vld [vmem:[#allocation4 + $0x40] sm:$0xff]
    %v303 = vld [vmem:[#allocation4 + $0x48] sm:$0xff]
    %v304 = vld [vmem:[#allocation4 + $0x50] sm:$0xff]
    %v305 = vld [vmem:[#allocation4 + $0x58] sm:$0xff]
    %v306 = vld [vmem:[#allocation4 + $0x60] sm:$0xff]
    %v307 = vld [vmem:[#allocation4 + $0x68] sm:$0xff]
    %v308 = vld [vmem:[#allocation4 + $0x70] sm:$0xff]
    %v309 = vld [vmem:[#allocation4 + $0x78] sm:$0xff]
    %310 = vmatpush.msra.mxu0 %v309
    %311 = vmatpush.msra.mxu0 %v308
    %312 = vmatpush.msra.mxu0 %v307
    %313 = vmatpush.msra.mxu0 %v306
    %314 = vmatpush.msra.mxu0 %v305
    %315 = vmatpush.msra.mxu0 %v304
    %316 = vmatpush.msra.mxu0 %v303
    %317 = vmatpush.msra.mxu0 %v302
    %318 = vmatpush.msra.mxu0 %v301
    %319 = vmatpush.msra.mxu0 %v300
    %320 = vmatpush.msra.mxu0 %v299
    %321 = vmatpush.msra.mxu0 %v298
    %322 = vmatpush.msra.mxu0 %v297
    %323 = vmatpush.msra.mxu0 %v296
    %324 = vmatpush.msra.mxu0 %v295
    %325 = vmatpush.msra.mxu0 %v294
    %326 = vmatmul.f32.gmra.mxu0 %v137
    %v327 = vpop.f32.mrf.mxu0
    %v328 = vadd.f32 0.0, %v327
    %329 = vdwg.mxu0
    %v330 = vperm.slane %v220, 0
    %v331 = vadd.f32 %v330, %v328
    %v332 = vtanh.pop %v331
    %v333 = vld [vmem:[%s5] sm:$0x1]
    %v335 = vperm.slane %v333, 0
    %v337 = vmul.f32 %v332, %v335
    %338 = vadd.xlane.f32.xlu0 %v337
    %v339 = vpop.xlane.xlu0 %338
    %v340 = vrot.slane %v339, 4
    %v341 = vmax.f32 %v339, %v340
    %v342 = vrot.slane %v341, 2
    %v343 = vmax.f32 %v341, %v342
    %v344 = vrot.slane %v343, 1
    %v345 = vmax.f32 %v343, %v344
    %v346 = vsub.f32 %v339, %v345
    %v347 = vmul.f32 %v346, 1.442695
    %v348 = vpow.pop %v347
    %v349 = vrot.slane %v348, 4
    %v350 = vadd.f32 %v348, %v349
    %v351 = vrot.slane %v350, 2
    %v352 = vadd.f32 %v350, %v351
    %v353 = vrot.slane %v352, 1
    %v354 = vadd.f32 %v352, %v353
    %v355 = vrcp.pop %v354
    %v356 = vmul.f32 %v348, %v355
    %v357 = vmul.f32 %v356, %v137
    %v358 = vrot.slane %v357, 4
    %v359 = vadd.f32 %v357, %v358
    %v360 = vrot.slane %v359, 2
    %v361 = vadd.f32 %v359, %v360
    %v362 = vrot.slane %v361, 1
    %v363 = vadd.f32 %v361, %v362
    %v364 = vld [vmem:[#allocation9] sm:$0xff]
    %v365 = vld [vmem:[#allocation9 + $0x8] sm:$0xff]
    %v366 = vld [vmem:[#allocation9 + $0x10] sm:$0xff]
    %v367 = vld [vmem:[#allocation9 + $0x18] sm:$0xff]
    %v368 = vld [vmem:[#allocation9 + $0x20] sm:$0xff]
    %v369 = vld [vmem:[#allocation9 + $0x28] sm:$0xff]
    %v370 = vld [vmem:[#allocation9 + $0x30] sm:$0xff]
    %v371 = vld [vmem:[#allocation9 + $0x38] sm:$0xff]
    %v372 = vld [vmem:[#allocation9 + $0x40] sm:$0xff]
    %v373 = vld [vmem:[#allocation9 + $0x48] sm:$0xff]
    %v374 = vld [vmem:[#allocation9 + $0x50] sm:$0xff]
    %v375 = vld [vmem:[#allocation9 + $0x58] sm:$0xff]
    %v376 = vld [vmem:[#allocation9 + $0x60] sm:$0xff]
    %v377 = vld [vmem:[#allocation9 + $0x68] sm:$0xff]
    %v378 = vld [vmem:[#allocation9 + $0x70] sm:$0xff]
    %v379 = vld [vmem:[#allocation9 + $0x78] sm:$0xff]
    %v380 = vld [vmem:[#allocation9 + $0x80] sm:$0xff]
    %v381 = vld [vmem:[#allocation9 + $0x88] sm:$0xff]
    %v382 = vld [vmem:[#allocation9 + $0x90] sm:$0xff]
    %v383 = vld [vmem:[#allocation9 + $0x98] sm:$0xff]
    %v384 = vld [vmem:[#allocation9 + $0xa0] sm:$0xff]
    %v385 = vld [vmem:[#allocation9 + $0xa8] sm:$0xff]
    %v386 = vld [vmem:[#allocation9 + $0xb0] sm:$0xff]
    %v387 = vld [vmem:[#allocation9 + $0xb8] sm:$0xff]
    %v388 = vld [vmem:[#allocation9 + $0xc0] sm:$0xff]
    %v389 = vld [vmem:[#allocation9 + $0xc8] sm:$0xff]
    %v390 = vld [vmem:[#allocation9 + $0xd0] sm:$0xff]
    %v391 = vld [vmem:[#allocation9 + $0xd8] sm:$0xff]
    %v392 = vld [vmem:[#allocation9 + $0xe0] sm:$0xff]
    %v393 = vld [vmem:[#allocation9 + $0xe8] sm:$0xff]
    %v394 = vld [vmem:[#allocation9 + $0xf0] sm:$0xff]
    %v395 = vld [vmem:[#allocation9 + $0xf8] sm:$0xff]
    %v396 = vld [vmem:[#allocation9 + $0x100] sm:$0xff]
    %v397 = vld [vmem:[#allocation9 + $0x108] sm:$0xff]
    %v398 = vld [vmem:[#allocation9 + $0x110] sm:$0xff]
    %v399 = vld [vmem:[#allocation9 + $0x118] sm:$0xff]
    %v400 = vld [vmem:[#allocation9 + $0x120] sm:$0xff]
    %v401 = vld [vmem:[#allocation9 + $0x128] sm:$0xff]
    %v402 = vld [vmem:[#allocation9 + $0x130] sm:$0xff]
    %v403 = vld [vmem:[#allocation9 + $0x138] sm:$0xff]
    %v404 = vld [vmem:[#allocation9 + $0x140] sm:$0xff]
    %v405 = vld [vmem:[#allocation9 + $0x148] sm:$0xff]
    %v406 = vld [vmem:[#allocation9 + $0x150] sm:$0xff]
    %v407 = vld [vmem:[#allocation9 + $0x158] sm:$0xff]
    %v408 = vld [vmem:[#allocation9 + $0x160] sm:$0xff]
    %v409 = vld [vmem:[#allocation9 + $0x168] sm:$0xff]
    %v410 = vld [vmem:[#allocation9 + $0x170] sm:$0xff]
    %v411 = vld [vmem:[#allocation9 + $0x178] sm:$0xff]
    %v412 = vld [vmem:[#allocation9 + $0x180] sm:$0xff]
    %v413 = vld [vmem:[#allocation9 + $0x188] sm:$0xff]
    %v414 = vld [vmem:[#allocation9 + $0x190] sm:$0xff]
    %v415 = vld [vmem:[#allocation9 + $0x198] sm:$0xff]
    %v416 = vld [vmem:[#allocation9 + $0x1a0] sm:$0xff]
    %v417 = vld [vmem:[#allocation9 + $0x1a8] sm:$0xff]
    %v418 = vld [vmem:[#allocation9 + $0x1b0] sm:$0xff]
    %v419 = vld [vmem:[#allocation9 + $0x1b8] sm:$0xff]
    %v420 = vld [vmem:[#allocation9 + $0x1c0] sm:$0xff]
    %v421 = vld [vmem:[#allocation9 + $0x1c8] sm:$0xff]
    %v422 = vld [vmem:[#allocation9 + $0x1d0] sm:$0xff]
    %v423 = vld [vmem:[#allocation9 + $0x1d8] sm:$0xff]
    %v424 = vld [vmem:[#allocation9 + $0x1e0] sm:$0xff]
    %v425 = vld [vmem:[#allocation9 + $0x1e8] sm:$0xff]
    %v426 = vld [vmem:[#allocation9 + $0x1f0] sm:$0xff]
    %v427 = vld [vmem:[#allocation9 + $0x1f8] sm:$0xff]
    %428 = vmatpush.msra.mxu0 %v424
    %429 = vmatpush.msra.mxu0 %v420
    %430 = vmatpush.msra.mxu0 %v416
    %431 = vmatpush.msra.mxu0 %v412
    %432 = vmatpush.msra.mxu0 %v408
    %433 = vmatpush.msra.mxu0 %v404
    %434 = vmatpush.msra.mxu0 %v400
    %435 = vmatpush.msra.mxu0 %v396
    %436 = vmatpush.msra.mxu0 %v392
    %437 = vmatpush.msra.mxu0 %v388
    %438 = vmatpush.msra.mxu0 %v384
    %439 = vmatpush.msra.mxu0 %v380
    %440 = vmatpush.msra.mxu0 %v376
    %441 = vmatpush.msra.mxu0 %v372
    %442 = vmatpush.msra.mxu0 %v368
    %443 = vmatpush.msra.mxu0 %v364
    %444 = vmatmul.f32.gmra.mxu0 %v363
    %v445 = vpop.f32.mrf.mxu0
    %v446 = vadd.f32 0.0, %v445
    %447 = vdwg.mxu0
    %448 = vmatpush.msra.mxu0 %v425
    %449 = vmatpush.msra.mxu0 %v421
    %450 = vmatpush.msra.mxu0 %v417
    %451 = vmatpush.msra.mxu0 %v413
    %452 = vmatpush.msra.mxu0 %v409
    %453 = vmatpush.msra.mxu0 %v405
    %454 = vmatpush.msra.mxu0 %v401
    %455 = vmatpush.msra.mxu0 %v397
    %456 = vmatpush.msra.mxu0 %v393
    %457 = vmatpush.msra.mxu0 %v389
    %458 = vmatpush.msra.mxu0 %v385
    %459 = vmatpush.msra.mxu0 %v381
    %460 = vmatpush.msra.mxu0 %v377
    %461 = vmatpush.msra.mxu0 %v373
    %462 = vmatpush.msra.mxu0 %v369
    %463 = vmatpush.msra.mxu0 %v365
    %464 = vmatmul.f32.gmra.mxu0 %v363
    %v465 = vpop.f32.mrf.mxu0
    %v466 = vadd.f32 0.0, %v465
    %467 = vdwg.mxu0
    %468 = vmatpush.msra.mxu0 %v426
    %469 = vmatpush.msra.mxu0 %v422
    %470 = vmatpush.msra.mxu0 %v418
    %471 = vmatpush.msra.mxu0 %v414
    %472 = vmatpush.msra.mxu0 %v410
    %473 = vmatpush.msra.mxu0 %v406
    %474 = vmatpush.msra.mxu0 %v402
    %475 = vmatpush.msra.mxu0 %v398
    %476 = vmatpush.msra.mxu0 %v394
    %477 = vmatpush.msra.mxu0 %v390
    %478 = vmatpush.msra.mxu0 %v386
    %479 = vmatpush.msra.mxu0 %v382
    %480 = vmatpush.msra.mxu0 %v378
    %481 = vmatpush.msra.mxu0 %v374
    %482 = vmatpush.msra.mxu0 %v370
    %483 = vmatpush.msra.mxu0 %v366
    %484 = vmatmul.f32.gmra.mxu0 %v363
    %v485 = vpop.f32.mrf.mxu0
    %v486 = vadd.f32 0.0, %v485
    %487 = vdwg.mxu0
    %488 = vmatpush.msra.mxu0 %v427
    %489 = vmatpush.msra.mxu0 %v423
    %490 = vmatpush.msra.mxu0 %v419
    %491 = vmatpush.msra.mxu0 %v415
    %492 = vmatpush.msra.mxu0 %v411
    %493 = vmatpush.msra.mxu0 %v407
    %494 = vmatpush.msra.mxu0 %v403
    %495 = vmatpush.msra.mxu0 %v399
    %496 = vmatpush.msra.mxu0 %v395
    %497 = vmatpush.msra.mxu0 %v391
    %498 = vmatpush.msra.mxu0 %v387
    %499 = vmatpush.msra.mxu0 %v383
    %500 = vmatpush.msra.mxu0 %v379
    %501 = vmatpush.msra.mxu0 %v375
    %502 = vmatpush.msra.mxu0 %v371
    %503 = vmatpush.msra.mxu0 %v367
    %504 = vmatmul.f32.gmra.mxu0 %v363
    %v505 = vpop.f32.mrf.mxu0
    %v506 = vadd.f32 0.0, %v505
    %507 = vdwg.mxu0
    %v508 = vld [vmem:[%s10] ss:$2 sm:$0x7]
    %v510 = vperm.slane %v508, 0
    %v511 = vperm.slane %v508, 1
    %v512 = vperm.slane %v508, 2
    %v516 = vadd.f32 %v446, %v510
    %v517 = vadd.f32 %v466, %v511
    %v518 = vadd.f32 %v486, %v512
    %v519 = vld [vmem:[#allocation10] sm:$0xff]
    %v520 = vld [vmem:[#allocation10 + $0x8] sm:$0xff]
    %v521 = vld [vmem:[#allocation10 + $0x10] sm:$0xff]
    %v522 = vld [vmem:[#allocation10 + $0x18] sm:$0xff]
    %v523 = vld [vmem:[#allocation10 + $0x20] sm:$0xff]
    %v524 = vld [vmem:[#allocation10 + $0x28] sm:$0xff]
    %v525 = vld [vmem:[#allocation10 + $0x30] sm:$0xff]
    %v526 = vld [vmem:[#allocation10 + $0x38] sm:$0xff]
    %v527 = vld [vmem:[#allocation10 + $0x40] sm:$0xff]
    %v528 = vld [vmem:[#allocation10 + $0x48] sm:$0xff]
    %v529 = vld [vmem:[#allocation10 + $0x50] sm:$0xff]
    %v530 = vld [vmem:[#allocation10 + $0x58] sm:$0xff]
    %v531 = vld [vmem:[#allocation10 + $0x60] sm:$0xff]
    %v532 = vld [vmem:[#allocation10 + $0x68] sm:$0xff]
    %v533 = vld [vmem:[#allocation10 + $0x70] sm:$0xff]
    %v534 = vld [vmem:[#allocation10 + $0x78] sm:$0xff]
    %v535 = vld [vmem:[#allocation10 + $0x80] sm:$0xff]
    %v536 = vld [vmem:[#allocation10 + $0x88] sm:$0xff]
    %v537 = vld [vmem:[#allocation10 + $0x90] sm:$0xff]
    %v538 = vld [vmem:[#allocation10 + $0x98] sm:$0xff]
    %v539 = vld [vmem:[#allocation10 + $0xa0] sm:$0xff]
    %v540 = vld [vmem:[#allocation10 + $0xa8] sm:$0xff]
    %v541 = vld [vmem:[#allocation10 + $0xb0] sm:$0xff]
    %v542 = vld [vmem:[#allocation10 + $0xb8] sm:$0xff]
    %v543 = vld [vmem:[#allocation10 + $0xc0] sm:$0xff]
    %v544 = vld [vmem:[#allocation10 + $0xc8] sm:$0xff]
    %v545 = vld [vmem:[#allocation10 + $0xd0] sm:$0xff]
    %v546 = vld [vmem:[#allocation10 + $0xd8] sm:$0xff]
    %v547 = vld [vmem:[#allocation10 + $0xe0] sm:$0xff]
    %v548 = vld [vmem:[#allocation10 + $0xe8] sm:$0xff]
    %v549 = vld [vmem:[#allocation10 + $0xf0] sm:$0xff]
    %v550 = vld [vmem:[#allocation10 + $0xf8] sm:$0xff]
    %v551 = vld [vmem:[#allocation10 + $0x100] sm:$0xff]
    %v552 = vld [vmem:[#allocation10 + $0x108] sm:$0xff]
    %v553 = vld [vmem:[#allocation10 + $0x110] sm:$0xff]
    %v554 = vld [vmem:[#allocation10 + $0x118] sm:$0xff]
    %v555 = vld [vmem:[#allocation10 + $0x120] sm:$0xff]
    %v556 = vld [vmem:[#allocation10 + $0x128] sm:$0xff]
    %v557 = vld [vmem:[#allocation10 + $0x130] sm:$0xff]
    %v558 = vld [vmem:[#allocation10 + $0x138] sm:$0xff]
    %v559 = vld [vmem:[#allocation10 + $0x140] sm:$0xff]
    %v560 = vld [vmem:[#allocation10 + $0x148] sm:$0xff]
    %v561 = vld [vmem:[#allocation10 + $0x150] sm:$0xff]
    %v562 = vld [vmem:[#allocation10 + $0x158] sm:$0xff]
    %v563 = vld [vmem:[#allocation10 + $0x160] sm:$0xff]
    %v564 = vld [vmem:[#allocation10 + $0x168] sm:$0xff]
    %v565 = vld [vmem:[#allocation10 + $0x170] sm:$0xff]
    %v566 = vld [vmem:[#allocation10 + $0x178] sm:$0xff]
    %567 = vmatpush.msra.mxu0 %v564
    %568 = vmatpush.msra.mxu0 %v561
    %569 = vmatpush.msra.mxu0 %v558
    %570 = vmatpush.msra.mxu0 %v555
    %571 = vmatpush.msra.mxu0 %v552
    %572 = vmatpush.msra.mxu0 %v549
    %573 = vmatpush.msra.mxu0 %v546
    %574 = vmatpush.msra.mxu0 %v543
    %575 = vmatpush.msra.mxu0 %v540
    %576 = vmatpush.msra.mxu0 %v537
    %577 = vmatpush.msra.mxu0 %v534
    %578 = vmatpush.msra.mxu0 %v531
    %579 = vmatpush.msra.mxu0 %v528
    %580 = vmatpush.msra.mxu0 %v525
    %581 = vmatpush.msra.mxu0 %v522
    %582 = vmatpush.msra.mxu0 %v519
    %583 = vmatmul.f32.gmra.mxu0 %v135
    %v584 = vpop.f32.mrf.mxu0
    %v585 = vadd.f32 0.0, %v584
    %586 = vdwg.mxu0
    %587 = vmatpush.msra.mxu0 %v565
    %588 = vmatpush.msra.mxu0 %v562
    %589 = vmatpush.msra.mxu0 %v559
    %590 = vmatpush.msra.mxu0 %v556
    %591 = vmatpush.msra.mxu0 %v553
    %592 = vmatpush.msra.mxu0 %v550
    %593 = vmatpush.msra.mxu0 %v547
    %594 = vmatpush.msra.mxu0 %v544
    %595 = vmatpush.msra.mxu0 %v541
    %596 = vmatpush.msra.mxu0 %v538
    %597 = vmatpush.msra.mxu0 %v535
    %598 = vmatpush.msra.mxu0 %v532
    %599 = vmatpush.msra.mxu0 %v529
    %600 = vmatpush.msra.mxu0 %v526
    %601 = vmatpush.msra.mxu0 %v523
    %602 = vmatpush.msra.mxu0 %v520
    %603 = vmatmul.f32.gmra.mxu0 %v135
    %v604 = vpop.f32.mrf.mxu0
    %v605 = vadd.f32 0.0, %v604
    %606 = vdwg.mxu0
    %607 = vmatpush.msra.mxu0 %v566
    %608 = vmatpush.msra.mxu0 %v563
    %609 = vmatpush.msra.mxu0 %v560
    %610 = vmatpush.msra.mxu0 %v557
    %611 = vmatpush.msra.mxu0 %v554
    %612 = vmatpush.msra.mxu0 %v551
    %613 = vmatpush.msra.mxu0 %v548
    %614 = vmatpush.msra.mxu0 %v545
    %615 = vmatpush.msra.mxu0 %v542
    %616 = vmatpush.msra.mxu0 %v539
    %617 = vmatpush.msra.mxu0 %v536
    %618 = vmatpush.msra.mxu0 %v533
    %619 = vmatpush.msra.mxu0 %v530
    %620 = vmatpush.msra.mxu0 %v527
    %621 = vmatpush.msra.mxu0 %v524
    %622 = vmatpush.msra.mxu0 %v521
    %623 = vmatmul.f32.gmra.mxu0 %v135
    %v624 = vpop.f32.mrf.mxu0
    %v625 = vadd.f32 0.0, %v624
    %626 = vdwg.mxu0
    %v627 = vadd.f32 %v516, %v585
    %v628 = vadd.f32 %v517, %v605
    %v629 = vadd.f32 %v518, %v625
    %v630 = vld [vmem:[%s11] sm:$0x1]
    %v631 = vadd.f32 %v506, %v630
    %v632 = vadd.f32 %v627, %v291
    %v633 = vxor.u32 %v632, 2147483648
    %v634 = vmul.f32 %v633, 1.442695
    %v635 = vpow.pop %v634
    %v636 = vadd.f32 %v635, 1.0
    %v637 = vrcp.pop %v636
    %v638 = vmul.f32 %v636, %v637
    %v639 = vsub.f32 1.0, %v638
    %v640 = vmul.f32 %v637, %v639
    %v641 = vadd.f32 %v637, %v640
    %vm642 = vweird.f32 %v636
    %vm643 = vweird.f32 %v637
    %vm644 = vmor %vm642, %vm643
    %v645 = vsel %vm644, %v637, %v641
    %v646 = vand.u32 2147483647, %v636
    %vm647 = vcmp.eq.f32.partialorder %v646, 8.507059e+37
    %v648 = vand.u32 %v636, 2147483648
    %v649 = vor.u32 1.1754944e-38, %v648
    %v650 = vsel %vm647, %v649, %v645
    %v651 = vmul.f32 1.0, %v650
    %v652 = vadd.f32 %v628, %v292
    %v653 = vxor.u32 %v652, 2147483648
    %v654 = vmul.f32 %v653, 1.442695
    %v655 = vpow.pop %v654
    %v656 = vadd.f32 %v655, 1.0
    %v657 = vrcp.pop %v656
    %v658 = vmul.f32 %v656, %v657
    %v659 = vsub.f32 1.0, %v658
    %v660 = vmul.f32 %v657, %v659
    %v661 = vadd.f32 %v657, %v660
    %vm662 = vweird.f32 %v656
    %vm663 = vweird.f32 %v657
    %vm664 = vmor %vm662, %vm663
    %v665 = vsel %vm664, %v657, %v661
    %v666 = vand.u32 2147483647, %v656
    %vm667 = vcmp.eq.f32.partialorder %v666, 8.507059e+37
    %v668 = vand.u32 %v656, 2147483648
    %v669 = vor.u32 1.1754944e-38, %v668
    %v670 = vsel %vm667, %v669, %v665
    %v671 = vmul.f32 1.0, %v670
    %v672 = vmul.f32 %v651, %v293
    %v673 = vadd.f32 %v629, %v672
    %v674 = vtanh.pop %v673
    %v675 = vsub.f32 1.0, %v671
    %v676 = vmul.f32 %v675, %v674
    %v677 = vmul.f32 %v671, %v136
    %v678 = vadd.f32 %v676, %v677
    %679 = vst [vmem:[%s13] sm:$0x1] %v678
    %v680 = vld [vmem:[#allocation12] sm:$0xff]
    %v681 = vld [vmem:[#allocation12 + $0x8] sm:$0xff]
    %v682 = vld [vmem:[#allocation12 + $0x10] sm:$0xff]
    %v683 = vld [vmem:[#allocation12 + $0x18] sm:$0xff]
    %v684 = vld [vmem:[#allocation12 + $0x20] sm:$0xff]
    %v685 = vld [vmem:[#allocation12 + $0x28] sm:$0xff]
    %v686 = vld [vmem:[#allocation12 + $0x30] sm:$0xff]
    %v687 = vld [vmem:[#allocation12 + $0x38] sm:$0xff]
    %v688 = vld [vmem:[#allocation12 + $0x40] sm:$0xff]
    %v689 = vld [vmem:[#allocation12 + $0x48] sm:$0xff]
    %v690 = vld [vmem:[#allocation12 + $0x50] sm:$0xff]
    %v691 = vld [vmem:[#allocation12 + $0x58] sm:$0xff]
    %v692 = vld [vmem:[#allocation12 + $0x60] sm:$0xff]
    %v693 = vld [vmem:[#allocation12 + $0x68] sm:$0xff]
    %v694 = vld [vmem:[#allocation12 + $0x70] sm:$0xff]
    %v695 = vld [vmem:[#allocation12 + $0x78] sm:$0xff]
    %696 = vmatpush.msra.mxu0 %v695
    %697 = vmatpush.msra.mxu0 %v694
    %698 = vmatpush.msra.mxu0 %v693
    %699 = vmatpush.msra.mxu0 %v692
    %700 = vmatpush.msra.mxu0 %v691
    %701 = vmatpush.msra.mxu0 %v690
    %702 = vmatpush.msra.mxu0 %v689
    %703 = vmatpush.msra.mxu0 %v688
    %704 = vmatpush.msra.mxu0 %v687
    %705 = vmatpush.msra.mxu0 %v686
    %706 = vmatpush.msra.mxu0 %v685
    %707 = vmatpush.msra.mxu0 %v684
    %708 = vmatpush.msra.mxu0 %v683
    %709 = vmatpush.msra.mxu0 %v682
    %710 = vmatpush.msra.mxu0 %v681
    %711 = vmatpush.msra.mxu0 %v680
    %712 = vmatmul.f32.gmra.mxu0 %v678
    %v713 = vpop.f32.mrf.mxu0
    %v714 = vadd.f32 0.0, %v713
    %715 = vdwg.mxu0
    %v716 = vadd.f32 %v631, %v714
    %vm717 = vcmask 1040384
    %v718 = vsel %vm717, %v716, -inf
    %719 = vmax.xlane.f32.xlu0 %v718
    %v720 = vpop.xlane.xlu0 %719
    %v721 = vsub.f32 %v716, %v720
    %v722 = vmul.f32 %v721, 1.442695
    %v723 = vpow.pop %v722
    %v724 = vsel %vm717, %v723, 0.0
    %725 = vadd.xlane.f32.xlu0 %v724
    %v726 = vpop.xlane.xlu0 %725
    %v727 = vlog2.pop %v726
    %v728 = vmul.f32 %v727, 0.6931472
    %v729 = vsub.f32 %v721, %v728
    %730 = vst [vmem:[#allocation13] sm:$0x1] %v729
    // Predicated region
    $region66: #{attn_decoder_cell.1} parent=1 // pred_check
      _
    $region67: #{attn_decoder_cell.1} parent=1 // pred_check_branch
      %732 = sbr.rel (0) target = $region69
    $region68: #{attn_decoder_cell.1} parent=1 // pred_region
      %734 = vsyncadd [#allocation6], 0
      %s736 = sshll.u32 [#allocation13], 4
      %s737 = int_to_ptr.vmem [resolvable:$true] %s736
      %s738 = sshll.u32 %s12, 4
      %s739 = int_to_ptr.hbm [resolvable:$true] %s738
      %741 = dma.vmem_to_hbm [thread:$0]  %s737, 16, %s739, [#allocation6]
    $region69: #{attn_decoder_cell.1} parent=1 // pred_fallthru
      _
    // Predicated region
    $region70: #{attn_decoder_cell.1} parent=1 // pred_check
      _
    $region71: #{attn_decoder_cell.1} parent=1 // pred_check_branch
      %743 = sbr.rel (0) target = $region73
    $region72: #{attn_decoder_cell.1} parent=1 // pred_region
      _
    $region73: #{attn_decoder_cell.1} parent=1 // pred_fallthru
      _
    // Predicated region
    $region74: #{attn_decoder_cell.1} parent=1 // pred_check
      _
    $region75: #{attn_decoder_cell.1} parent=1 // pred_check_branch
      %745 = sbr.rel (0) target = $region77
    $region76: #{attn_decoder_cell.1} parent=1 // pred_region
      %747 = dma.done [#allocation6], 16
    $region77: #{attn_decoder_cell.1} parent=1 // pred_fallthru
      _
    // Predicated region
    $region78: #{attn_decoder_cell.1} parent=1 // pred_check
      _
    $region79: #{attn_decoder_cell.1} parent=1 // pred_check_branch
      %749 = sbr.rel (0) target = $region81
    $region80: #{attn_decoder_cell.1} parent=1 // pred_region
      _
    $region81: #{attn_decoder_cell.1} parent=1 // pred_fallthru
      _
    %750 = vsyncpa [#allocation5], 1
    %751 = vsyncpa [#allocation8], 1
    %752 = vsyncpa [#allocation11], 1
    %753 = vsyncpa [#allocation6], 1

</llo_original>
